<compile_context>
chip_gen: v7x
topology: tpu7x:2x2x1
jax: 0.10.0
libtpu: 0.0.40
codegen_flags: <defaults>
</compile_context>

<pallas_src>
import jax
import jax.numpy as jnp
from jax import lax
from jax.experimental import pallas as pl
from jax.experimental.pallas import tpu as pltpu


def resblock_kernel(
    scal_ref,   # SMEM (1, 4): [gain1, bias1, gain2, bias2]
    x_ref,      # VMEM (TB, F)
    w1_ref,     # VMEM (F, F)  native PyTorch (out, in) layout
    w2_ref,     # VMEM (F, F)  native PyTorch (out, in) layout
    vec_ref,    # VMEM (8, F): rows = [b1, b2, gamma1, beta1, gamma2, beta2, 0, 0]
    o_ref,      # VMEM (TB, F)
):
    x = x_ref[...]

    gain1 = scal_ref[0, 0]
    bias1 = scal_ref[0, 1]
    gain2 = scal_ref[0, 2]
    bias2 = scal_ref[0, 3]

    vp = vec_ref[...]
    b1 = vp[0:1, :]
    b2 = vp[1:2, :]
    g1 = vp[2:3, :]
    be1 = vp[3:4, :]
    g2 = vp[4:5, :]
    be2 = vp[5:6, :]

    # Contract h's axis 1 against the weight's axis 1 -> equivalent to h @ W.T,
    # but lets the MXU consume the native (out, in) layout (no wrapper transpose).
    dn = (((1,), (1,)), ((), ()))

    # norm1 (scalar affine) -> layer1 (Linear, MXU, f32 accumulate)
    h1 = x * gain1 + bias1
    z1 = lax.dot_general(h1.astype(w1_ref.dtype), w1_ref[...], dn,
                         preferred_element_type=jnp.float32) + b1

    # act1: Supact -> (gamma + sigmoid(beta * z) * (1 - gamma)) * z
    o1 = (g1 + jax.nn.sigmoid(be1 * z1) * (1.0 - g1)) * z1

    # norm2 -> layer2
    h2 = o1 * gain2 + bias2
    z2 = lax.dot_general(h2.astype(w2_ref.dtype), w2_ref[...], dn,
                         preferred_element_type=jnp.float32) + b2

    # act2: Supact, then residual skip (Identity since in_size == out_size)
    o2 = (g2 + jax.nn.sigmoid(be2 * z2) * (1.0 - g2)) * z2

    o_ref[...] = (o2 + x).astype(o_ref.dtype)


def _pick_tile_b(B):
    """Prefer large batch tiles for MXU occupancy, but keep >=2 grid steps
    so the single grid axis can still be split across v7x's 2 TensorCores."""
    for cand in (512, 256, 128, 64, 32, 16, 8):
        if B % cand == 0 and B // cand >= 2:
            return cand
    return B  # single-step fallback (tiny batches)


def resblock_forward(x, params, *, tile_b=None):
    """x: (B, F) float32. params: dict of ResBlock parameters (PyTorch layouts).

    For best TPU performance F should be a multiple of 128 (lane-dense stores) and
    B a multiple of 256; weights may be supplied in bfloat16 (f32 accumulation is
    kept via preferred_element_type).
    """
    B, F = x.shape
    w1 = params["w1"]     # (F, F), native (out, in) -- NOT transposed here
    w2 = params["w2"]     # (F, F)
    assert w1.shape == (F, F) and w2.shape == (F, F)
    assert B % 8 == 0, "batch must be a multiple of 8 (sublane)"

    if tile_b is None:
        tile_b = _pick_tile_b(B)
    assert B % tile_b == 0

    # Four Affine scalars -> one small SMEM block.
    scalars = jnp.stack([
        params["norm1_gain"].reshape(()), params["norm1_bias"].reshape(()),
        params["norm2_gain"].reshape(()), params["norm2_bias"].reshape(()),
    ]).reshape(1, 4).astype(jnp.float32)

    # Six per-feature vectors -> one (8, F) slab (2 zero rows for sublane alignment).
    zeros = jnp.zeros((F,), jnp.float32)
    vec = jnp.stack([
        params["b1"], params["b2"],
        params["act1_gamma"], params["act1_beta"],
        params["act2_gamma"], params["act2_beta"],
        zeros, zeros,
    ]).astype(jnp.float32)                     # (8, F)

    grid = (B // tile_b,)
    x_spec = pl.BlockSpec((tile_b, F), lambda i: (i, 0))
    w_spec = pl.BlockSpec((F, F), lambda i: (0, 0))         # resident across the grid
    vec_spec = pl.BlockSpec((8, F), lambda i: (0, 0))
    scal_spec = pl.BlockSpec((1, 4), lambda i: (0, 0), memory_space=pltpu.SMEM)

    wbytes = jnp.dtype(w1.dtype).itemsize
    # Explicit VMEM budget: 2 weights (double-buffered) + in/out activation tiles + params.
    vmem_needed = (2 * 2 * F * F * wbytes          # w1, w2, double-buffered
                   + 2 * 2 * tile_b * F * 4        # x tile + out tile, double-buffered
                   + 2 * 8 * F * 4                 # stacked vector params
                   + (4 << 20))                    # headroom for intermediates/spills
    vmem_limit = int(min(max(vmem_needed, 32 * 1024 * 1024), 96 * 1024 * 1024))

    cost = pl.CostEstimate(
        flops=int(2 * 2 * B * F * F),              # two (B,F)x(F,F) matmuls
        transcendentals=int(2 * B * F),            # two sigmoids per element
        bytes_accessed=int(2 * B * F * 4 + 2 * F * F * wbytes + 8 * F * 4 + 16),
    )

    out = pl.pallas_call(
        resblock_kernel,
        out_shape=jax.ShapeDtypeStruct((B, F), x.dtype),
        grid=grid,
        in_specs=[scal_spec, x_spec, w_spec, w_spec, vec_spec],
        out_specs=x_spec,
        compiler_params=pltpu.CompilerParams(
            dimension_semantics=("parallel",),
            vmem_limit_bytes=vmem_limit,
        ),
        cost_estimate=cost,
    )(scalars, x, w1, w2, vec)
    return out


def resblock_reference(x, params):
    """Pure-JAX reference matching the PyTorch forward exactly."""
    def affine(v, gain, bias):
        return v * gain + bias

    def supact(v, gamma, beta):
        inv = jax.nn.sigmoid(beta * v)
        return (gamma + inv * (1.0 - gamma)) * v

    xskip = x  # Identity (in_size == out_size)
    h1 = affine(x, params["norm1_gain"][0], params["norm1_bias"][0])
    z1 = h1 @ params["w1"].T + params["b1"]
    o1 = supact(z1, params["act1_gamma"], params["act1_beta"])
    h2 = affine(o1, params["norm2_gain"][0], params["norm2_bias"][0])
    z2 = h2 @ params["w2"].T + params["b2"]
    o2 = supact(z2, params["act2_gamma"], params["act2_beta"]) + xskip
    return o2


def init_params(key, in_size, out_size):
    assert in_size == out_size, "Supact(in_size) broadcast requires in_size == out_size"
    ks = jax.random.split(key, 4)
    bound1 = 1.0 / jnp.sqrt(in_size)
    bound2 = 1.0 / jnp.sqrt(out_size)
    return {
        "w1": jax.random.uniform(ks[0], (out_size, in_size), jnp.float32, -bound1, bound1),
        "b1": jax.random.uniform(ks[1], (out_size,), jnp.float32, -bound1, bound1),
        "w2": jax.random.uniform(ks[2], (out_size, out_size), jnp.float32, -bound2, bound2),
        "b2": jax.random.uniform(ks[3], (out_size,), jnp.float32, -bound2, bound2),
        "norm1_gain": jnp.ones((1,), jnp.float32),
        "norm1_bias": jnp.zeros((1,), jnp.float32),
        "norm2_gain": jnp.ones((1,), jnp.float32),
        "norm2_bias": jnp.zeros((1,), jnp.float32),
        "act1_gamma": jnp.ones((in_size,), jnp.float32),
        "act1_beta": jnp.zeros((in_size,), jnp.float32),
        "act2_gamma": jnp.ones((in_size,), jnp.float32),
        "act2_beta": jnp.zeros((in_size,), jnp.float32),
    }


if __name__ == "__main__":
    # Lane-dense hidden size (multiple of 128) and a batch big enough for a real
    # MXU tile while keeping >=2 grid steps.
    B, F = 256, 128
    key = jax.random.PRNGKey(0)
    kx, kp = jax.random.split(key)
    x = jax.random.normal(kx, (B, F), jnp.float32)
    params = init_params(kp, F, F)

    # Non-trivial (deterministic) norm/act params so every op is exercised.
    params["norm1_gain"] = jnp.array([1.25], jnp.float32)
    params["norm1_bias"] = jnp.array([-0.1], jnp.float32)
    params["norm2_gain"] = jnp.array([0.8], jnp.float32)
    params["norm2_bias"] = jnp.array([0.05], jnp.float32)
    params["act1_gamma"] = 0.9 * jnp.ones((F,), jnp.float32)
    params["act1_beta"] = 0.5 * jnp.ones((F,), jnp.float32)
    params["act2_gamma"] = 1.1 * jnp.ones((F,), jnp.float32)
    params["act2_beta"] = -0.3 * jnp.ones((F,), jnp.float32)

    out = resblock_forward(x, params)   # tile_b auto-picked -> 128, grid=(2,)
    out = jax.block_until_ready(out)

    ref = resblock_reference(x, params)
    assert out.shape == (B, F)
    assert jnp.allclose(out, ref, atol=1e-5, rtol=1e-5), (
        f"max abs err {jnp.max(jnp.abs(out - ref))}")
    print("KERNEL_OK")
</pallas_src>

<mosaic_0001>
module attributes {stable_mosaic.version = 11 : i64} {
  func.func @resblock_kernel(%arg0: i32, %arg1: memref<1x4xf32, #tpu.memory_space<smem>>, %arg2: memref<128x128xf32, #tpu.memory_space<vmem>>, %arg3: memref<128x128xf32, #tpu.memory_space<vmem>>, %arg4: memref<128x128xf32, #tpu.memory_space<vmem>>, %arg5: memref<8x128xf32, #tpu.memory_space<vmem>>, %arg6: memref<128x128xf32, #tpu.memory_space<vmem>>) attributes {dimension_semantics = [#tpu.dimension_semantics<parallel>], iteration_bounds = array<i64: 2>, scalar_prefetch = 0 : i64, scratch_operands = 0 : i64, tpu.core_type = #tpu.core_type<tc>, window_params = [{transform_indices = @transform_0, window_bounds = array<i64: 1, 4>}, {transform_indices = @transform_1, window_bounds = array<i64: 128, 128>}, {pipeline_mode = #tpu.pipeline_mode<synchronous>, transform_indices = @transform_2, window_bounds = array<i64: 128, 128>}, {pipeline_mode = #tpu.pipeline_mode<synchronous>, transform_indices = @transform_3, window_bounds = array<i64: 128, 128>}, {pipeline_mode = #tpu.pipeline_mode<synchronous>, transform_indices = @transform_4, window_bounds = array<i64: 8, 128>}, {transform_indices = @transform_5, window_bounds = array<i64: 128, 128>}]} {
    %c0 = arith.constant 0 : index
    %c0_0 = arith.constant 0 : index
    %0 = vector.load %arg2[%c0, %c0_0] : memref<128x128xf32, #tpu.memory_space<vmem>>, vector<128x128xf32>
    %c0_1 = arith.constant 0 : index
    %c0_2 = arith.constant 0 : index
    %1 = memref.load %arg1[%c0_1, %c0_2] : memref<1x4xf32, #tpu.memory_space<smem>>
    %c0_3 = arith.constant 0 : index
    %c1 = arith.constant 1 : index
    %2 = memref.load %arg1[%c0_3, %c1] : memref<1x4xf32, #tpu.memory_space<smem>>
    %c0_4 = arith.constant 0 : index
    %c2 = arith.constant 2 : index
    %3 = memref.load %arg1[%c0_4, %c2] : memref<1x4xf32, #tpu.memory_space<smem>>
    %c0_5 = arith.constant 0 : index
    %c3 = arith.constant 3 : index
    %4 = memref.load %arg1[%c0_5, %c3] : memref<1x4xf32, #tpu.memory_space<smem>>
    %c0_6 = arith.constant 0 : index
    %c0_7 = arith.constant 0 : index
    %5 = vector.load %arg5[%c0_6, %c0_7] : memref<8x128xf32, #tpu.memory_space<vmem>>, vector<8x128xf32>
    %6 = vector.extract_strided_slice %5 {offsets = [0, 0], sizes = [1, 128], strides = [1, 1]} : vector<8x128xf32> to vector<1x128xf32>
    %7 = vector.extract_strided_slice %5 {offsets = [1, 0], sizes = [1, 128], strides = [1, 1]} : vector<8x128xf32> to vector<1x128xf32>
    %8 = vector.extract_strided_slice %5 {offsets = [2, 0], sizes = [1, 128], strides = [1, 1]} : vector<8x128xf32> to vector<1x128xf32>
    %9 = vector.extract_strided_slice %5 {offsets = [3, 0], sizes = [1, 128], strides = [1, 1]} : vector<8x128xf32> to vector<1x128xf32>
    %10 = vector.extract_strided_slice %5 {offsets = [4, 0], sizes = [1, 128], strides = [1, 1]} : vector<8x128xf32> to vector<1x128xf32>
    %11 = vector.extract_strided_slice %5 {offsets = [5, 0], sizes = [1, 128], strides = [1, 1]} : vector<8x128xf32> to vector<1x128xf32>
    %12 = vector.broadcast %1 : f32 to vector<128x128xf32>
    %13 = arith.mulf %0, %12 : vector<128x128xf32>
    %14 = vector.broadcast %2 : f32 to vector<128x128xf32>
    %15 = arith.addf %13, %14 : vector<128x128xf32>
    %c0_8 = arith.constant 0 : index
    %c0_9 = arith.constant 0 : index
    %16 = vector.load %arg3[%c0_8, %c0_9] : memref<128x128xf32, #tpu.memory_space<vmem>>, vector<128x128xf32>
    %cst = arith.constant dense<0.000000e+00> : vector<128x128xf32>
    %17 = tpu.matmul %15, %16, %cst {dimension_numbers = #tpu.dot_dimension_numbers<[1], [1], [0], [0], [0, 0, 1, 0], [], []>} : vector<128x128xf32>, vector<128x128xf32>, vector<128x128xf32> -> vector<128x128xf32>
    %18 = vector.broadcast %6 : vector<1x128xf32> to vector<128x128xf32>
    %19 = arith.addf %17, %18 : vector<128x128xf32>
    %20 = vector.broadcast %9 : vector<1x128xf32> to vector<128x128xf32>
    %21 = arith.mulf %20, %19 : vector<128x128xf32>
    %22 = arith.negf %21 : vector<128x128xf32>
    %23 = math.exp %22 : vector<128x128xf32>
    %cst_10 = arith.constant 1.000000e+00 : f32
    %24 = vector.broadcast %cst_10 : f32 to vector<128x128xf32>
    %25 = arith.addf %24, %23 : vector<128x128xf32>
    %26 = arith.divf %24, %25 : vector<128x128xf32>
    %cst_11 = arith.constant 1.000000e+00 : f32
    %27 = vector.broadcast %cst_11 : f32 to vector<1x128xf32>
    %28 = arith.subf %27, %8 : vector<1x128xf32>
    %29 = vector.broadcast %28 : vector<1x128xf32> to vector<128x128xf32>
    %30 = arith.mulf %26, %29 : vector<128x128xf32>
    %31 = vector.broadcast %8 : vector<1x128xf32> to vector<128x128xf32>
    %32 = arith.addf %31, %30 : vector<128x128xf32>
    %33 = arith.mulf %32, %19 : vector<128x128xf32>
    %34 = vector.broadcast %3 : f32 to vector<128x128xf32>
    %35 = arith.mulf %33, %34 : vector<128x128xf32>
    %36 = vector.broadcast %4 : f32 to vector<128x128xf32>
    %37 = arith.addf %35, %36 : vector<128x128xf32>
    %c0_12 = arith.constant 0 : index
    %c0_13 = arith.constant 0 : index
    %38 = vector.load %arg4[%c0_12, %c0_13] : memref<128x128xf32, #tpu.memory_space<vmem>>, vector<128x128xf32>
    %cst_14 = arith.constant dense<0.000000e+00> : vector<128x128xf32>
    %39 = tpu.matmul %37, %38, %cst_14 {dimension_numbers = #tpu.dot_dimension_numbers<[1], [1], [0], [0], [0, 0, 1, 0], [], []>} : vector<128x128xf32>, vector<128x128xf32>, vector<128x128xf32> -> vector<128x128xf32>
    %40 = vector.broadcast %7 : vector<1x128xf32> to vector<128x128xf32>
    %41 = arith.addf %39, %40 : vector<128x128xf32>
    %42 = vector.broadcast %11 : vector<1x128xf32> to vector<128x128xf32>
    %43 = arith.mulf %42, %41 : vector<128x128xf32>
    %44 = arith.negf %43 : vector<128x128xf32>
    %45 = math.exp %44 : vector<128x128xf32>
    %cst_15 = arith.constant 1.000000e+00 : f32
    %46 = vector.broadcast %cst_15 : f32 to vector<128x128xf32>
    %47 = arith.addf %46, %45 : vector<128x128xf32>
    %48 = arith.divf %46, %47 : vector<128x128xf32>
    %cst_16 = arith.constant 1.000000e+00 : f32
    %49 = vector.broadcast %cst_16 : f32 to vector<1x128xf32>
    %50 = arith.subf %49, %10 : vector<1x128xf32>
    %51 = vector.broadcast %50 : vector<1x128xf32> to vector<128x128xf32>
    %52 = arith.mulf %48, %51 : vector<128x128xf32>
    %53 = vector.broadcast %10 : vector<1x128xf32> to vector<128x128xf32>
    %54 = arith.addf %53, %52 : vector<128x128xf32>
    %55 = arith.mulf %54, %41 : vector<128x128xf32>
    %56 = arith.addf %55, %0 : vector<128x128xf32>
    %c0_17 = arith.constant 0 : index
    %c0_18 = arith.constant 0 : index
    %57 = vector.load %arg6[%c0_17, %c0_18] : memref<128x128xf32, #tpu.memory_space<vmem>>, vector<128x128xf32>
    tpu.vector_store %arg6[%c0_17, %c0_18], %56 {strides = array<i32>} : memref<128x128xf32, #tpu.memory_space<vmem>>, vector<128x128xf32>,
    return
  }
  func.func @transform_0(%arg0: i32) -> (i32, i32) {
    %c0_i32 = arith.constant 0 : i32
    %c0_i32_0 = arith.constant 0 : i32
    %c0_i32_1 = arith.constant 0 : i32
    return %c0_i32, %c0_i32_0 : i32, i32
  }
  func.func @transform_1(%arg0: i32) -> (i32, i32) {
    %c0_i32 = arith.constant 0 : i32
    %c0_i32_0 = arith.constant 0 : i32
    return %arg0, %c0_i32 : i32, i32
  }
  func.func @transform_2(%arg0: i32) -> (i32, i32) {
    %c0_i32 = arith.constant 0 : i32
    %c0_i32_0 = arith.constant 0 : i32
    %c0_i32_1 = arith.constant 0 : i32
    return %c0_i32, %c0_i32_0 : i32, i32
  }
  func.func @transform_3(%arg0: i32) -> (i32, i32) {
    %c0_i32 = arith.constant 0 : i32
    %c0_i32_0 = arith.constant 0 : i32
    %c0_i32_1 = arith.constant 0 : i32
    return %c0_i32, %c0_i32_0 : i32, i32
  }
  func.func @transform_4(%arg0: i32) -> (i32, i32) {
    %c0_i32 = arith.constant 0 : i32
    %c0_i32_0 = arith.constant 0 : i32
    %c0_i32_1 = arith.constant 0 : i32
    return %c0_i32, %c0_i32_0 : i32, i32
  }
  func.func @transform_5(%arg0: i32) -> (i32, i32) {
    %c0_i32 = arith.constant 0 : i32
    %c0_i32_0 = arith.constant 0 : i32
    return %arg0, %c0_i32 : i32, i32
  }
}

</mosaic_0001>

<llo_original>
// kernel: tpu_custom_call.1
$region0: #{tpu_custom_call.1}
  #allocation0 [shape = 'u32[]', space=smem, size = 0x4, offset = 0x4, fixed_abs, tag = 'smem constant byte address 0x4 - core index']
  #allocation1 [shape = 'u32[144,128]{1,0:T(1,128)}', space=vmem, size = 0x12000, scoped, tag = 'internal scratch']
  %s0 = inlined_call_operand.hbm [shape: f32[1,4], index: 0, kind: input, shape index: {}]
  %s1 = inlined_call_operand.hbm [shape: f32[256,128], index: 1, kind: input, shape index: {}]
  %s2 = inlined_call_operand.hbm [shape: f32[128,128], index: 2, kind: input, shape index: {}]
  %s3 = inlined_call_operand.hbm [shape: f32[128,128], index: 3, kind: input, shape index: {}]
  %s4 = inlined_call_operand.vmem [shape: f32[8,128], index: 4, kind: input, shape index: {}]
  %s5 = inlined_call_operand.hbm [shape: f32[256,128], index: 5, kind: output, shape index: {}]
  %s6 = sld [smem:[#allocation0]]
  $region69: #{tpu_custom_call.1} parent=0
    _
  %s8 = ssub.s32 1, %s6
  %s9 = scalar_select 0, %s8, %s6
  $region1: #{tpu_custom_call.1} parent=0
    #allocation2 [shape = 'u8[512]{0}', space=smem, size = 0x200, scoped, tag = 'input window, operand 0, single buffered']
    #allocation3 [shape = 's32[2]{0}', space=sflag, size = 0x8, scoped, tag = 'scoped memory for tpu_custom_call.1']
    #allocation4 [shape = 's32[2]{0}', space=sflag, size = 0x8, scoped, tag = 'scoped memory for tpu_custom_call.1']
    #allocation5 [shape = 's32[2]{0}', space=sflag, size = 0x8, scoped, tag = 'scoped memory for tpu_custom_call.1']
    #allocation6 [shape = 'u8[131072]{0}', space=vmem, size = 0x20000, scoped, tag = 'input window, operand 1']
    #allocation7 [shape = 'u8[65536]{0}', space=vmem, size = 0x10000, scoped, tag = 'input window, operand 2, single buffered']
    #allocation8 [shape = 's32[1]{0}', space=sflag, size = 0x4, scoped, tag = 'scoped memory for tpu_custom_call.1']
    #allocation9 [shape = 'u8[65536]{0}', space=vmem, size = 0x10000, scoped, tag = 'input window, operand 3, single buffered']
    #allocation10 [shape = 'u8[131072]{0}', space=vmem, size = 0x20000, scoped, tag = 'output window, operand 0']
    %10 = vsyncpa [#allocation5], 0
    %11 = vsyncpa [#allocation3], 0
    %s12 = scalar_lea.sflag [#allocation3], 1
    %13 = vsyncpa %s12, 0
    %14 = vsyncpa [#allocation8], 0
    %15 = vsyncpa [#allocation4], 0
    %s16 = scalar_lea.sflag [#allocation4], 1
    %17 = vsyncpa %s16, 0
    loop: start=0, step=1, limit=4
    $region2: #{tpu_custom_call.1} parent=1 // loop_pre_header
      _
    $region3: #{tpu_custom_call.1} parent=1 // loop_header
      %s19 = sphi 0, %s23
      %p20 = scmp.ge.s32.totalorder %s19, 4
      %s27 = sphi 0, %s27
      %s29 = sphi 0, %s27
      %s30 = sphi 0, %s29
      %s44 = sphi 0, %s30
      %s50 = sphi 0, %s52
      %s53 = sphi 0, %s50
      %s54 = sphi 0, %s53
      %s70 = sphi 0, %s54
      %s74 = sphi 0, %s74
      %s76 = sphi 0, %s74
      %s77 = sphi 0, %s76
      %s91 = sphi 0, %s77
      %s95 = sphi 0, %s95
      %s97 = sphi 0, %s95
      %s98 = sphi 0, %s97
      %s112 = sphi 0, %s98
      %s116 = sphi 0, %s116
      %s118 = sphi 0, %s116
      %s119 = sphi 0, %s118
      %s133 = sphi 0, %s119
      %s139 = sphi 0, %s141
      %s142 = sphi 0, %s139
      %s143 = sphi 0, %s142
      %s159 = sphi 0, %s143
    $region4: #{tpu_custom_call.1} parent=1 // loop_header_branch
      %22 = sbr.rel (%p20) target = $region8
    $region5: #{tpu_custom_call.1} parent=1 // loop_body
      %s24 = ssub.s32 %s19, 1
      %s25 = ssub.s32 %s19, 2
      %s26 = sadd.s32 %s19, 1
      %s28 = sadd.s32 %s27, 1
      %p31 = scmp.eq.s32.totalorder %s19, 1
      %p32 = scmp.ne.s32.totalorder %s27, %s29
      %p33 = scmp.eq.s32.totalorder %s19, 0
      %p34 = por %p32, %p33
      %p35 = scmp.ne.s32.totalorder %s27, %s29
      %p36 = scmp.eq.s32.totalorder %s24, 1
      %p37 = por %p35, %p36
      %p38 = scmp.ne.s32.totalorder %s29, %s30
      %p39 = scmp.eq.s32.totalorder %s24, 0
      %p40 = por %p38, %p39
      %p41 = scmp.ne.s32.totalorder %s29, %s30
      %p42 = scmp.eq.s32.totalorder %s25, 1
      %p43 = por %p41, %p42
      %p45 = scmp.ne.s32.totalorder %s30, %s44
      %p46 = scmp.eq.s32.totalorder %s25, 0
      %p47 = por %p45, %p46
      %s48 = ssub.s32 %s19, %s26
      %p49 = scmp.eq.s32.totalorder %s48, 0
      %s51 = sadd.s32 %s50, 1
      %s52 = scalar_select %p49, %s50, %s51
      %p55 = pneg %p49
      %p56 = scmp.eq.s32.totalorder %s19, 1
      %p57 = por %p55, %p56
      %p58 = scmp.ne.s32.totalorder %s50, %s53
      %p59 = scmp.eq.s32.totalorder %s19, 0
      %p60 = por %p58, %p59
      %p61 = scmp.ne.s32.totalorder %s50, %s53
      %p62 = scmp.eq.s32.totalorder %s24, 1
      %p63 = por %p61, %p62
      %p64 = scmp.ne.s32.totalorder %s53, %s54
      %p65 = scmp.eq.s32.totalorder %s24, 0
      %p66 = por %p64, %p65
      %p67 = scmp.ne.s32.totalorder %s53, %s54
      %p68 = scmp.eq.s32.totalorder %s25, 1
      %p69 = por %p67, %p68
      %p71 = scmp.ne.s32.totalorder %s54, %s70
      %p72 = scmp.eq.s32.totalorder %s25, 0
      %p73 = por %p71, %p72
      %s75 = sadd.s32 %s74, 1
      %p78 = scmp.eq.s32.totalorder %s19, 1
      %p79 = scmp.ne.s32.totalorder %s74, %s76
      %p80 = scmp.eq.s32.totalorder %s19, 0
      %p81 = por %p79, %p80
      %p82 = scmp.ne.s32.totalorder %s74, %s76
      %p83 = scmp.eq.s32.totalorder %s24, 1
      %p84 = por %p82, %p83
      %p85 = scmp.ne.s32.totalorder %s76, %s77
      %p86 = scmp.eq.s32.totalorder %s24, 0
      %p87 = por %p85, %p86
      %p88 = scmp.ne.s32.totalorder %s76, %s77
      %p89 = scmp.eq.s32.totalorder %s25, 1
      %p90 = por %p88, %p89
      %p92 = scmp.ne.s32.totalorder %s77, %s91
      %p93 = scmp.eq.s32.totalorder %s25, 0
      %p94 = por %p92, %p93
      %s96 = sadd.s32 %s95, 1
      %p99 = scmp.eq.s32.totalorder %s19, 1
      %p100 = scmp.ne.s32.totalorder %s95, %s97
      %p101 = scmp.eq.s32.totalorder %s19, 0
      %p102 = por %p100, %p101
      %p103 = scmp.ne.s32.totalorder %s95, %s97
      %p104 = scmp.eq.s32.totalorder %s24, 1
      %p105 = por %p103, %p104
      %p106 = scmp.ne.s32.totalorder %s97, %s98
      %p107 = scmp.eq.s32.totalorder %s24, 0
      %p108 = por %p106, %p107
      %p109 = scmp.ne.s32.totalorder %s97, %s98
      %p110 = scmp.eq.s32.totalorder %s25, 1
      %p111 = por %p109, %p110
      %p113 = scmp.ne.s32.totalorder %s98, %s112
      %p114 = scmp.eq.s32.totalorder %s25, 0
      %p115 = por %p113, %p114
      %s117 = sadd.s32 %s116, 1
      %p120 = scmp.eq.s32.totalorder %s19, 1
      %p121 = scmp.ne.s32.totalorder %s116, %s118
      %p122 = scmp.eq.s32.totalorder %s19, 0
      %p123 = por %p121, %p122
      %p124 = scmp.ne.s32.totalorder %s116, %s118
      %p125 = scmp.eq.s32.totalorder %s24, 1
      %p126 = por %p124, %p125
      %p127 = scmp.ne.s32.totalorder %s118, %s119
      %p128 = scmp.eq.s32.totalorder %s24, 0
      %p129 = por %p127, %p128
      %p130 = scmp.ne.s32.totalorder %s118, %s119
      %p131 = scmp.eq.s32.totalorder %s25, 1
      %p132 = por %p130, %p131
      %p134 = scmp.ne.s32.totalorder %s119, %s133
      %p135 = scmp.eq.s32.totalorder %s25, 0
      %p136 = por %p134, %p135
      %s137 = ssub.s32 %s19, %s26
      %p138 = scmp.eq.s32.totalorder %s137, 0
      %s140 = sadd.s32 %s139, 1
      %s141 = scalar_select %p138, %s139, %s140
      %p144 = pneg %p138
      %p145 = scmp.eq.s32.totalorder %s19, 1
      %p146 = por %p144, %p145
      %p147 = scmp.ne.s32.totalorder %s139, %s142
      %p148 = scmp.eq.s32.totalorder %s19, 0
      %p149 = por %p147, %p148
      %p150 = scmp.ne.s32.totalorder %s139, %s142
      %p151 = scmp.eq.s32.totalorder %s24, 1
      %p152 = por %p150, %p151
      %p153 = scmp.ne.s32.totalorder %s142, %s143
      %p154 = scmp.eq.s32.totalorder %s24, 0
      %p155 = por %p153, %p154
      %p156 = scmp.ne.s32.totalorder %s142, %s143
      %p157 = scmp.eq.s32.totalorder %s25, 1
      %p158 = por %p156, %p157
      %p160 = scmp.ne.s32.totalorder %s143, %s159
      %p161 = scmp.eq.s32.totalorder %s25, 0
      %p162 = por %p160, %p161
      %p163 = scmp.le.s32.totalorder 1, %s19
      %p164 = scmp.lt.s32.totalorder %s19, 3
      %p165 = pnand %p163, %p164
      %p166 = pneg %p165
      // Predicated region
      $region9: #{tpu_custom_call.1} parent=5 // pred_check
        _
      $region10: #{tpu_custom_call.1} parent=5 // pred_check_branch
        %168 = sbr.rel (%p165) target = $region12
      $region11: #{tpu_custom_call.1} parent=5 // pred_region
        %s169 = ssub.s32 %s19, 1
        // Predicated region
        $region13: #{tpu_custom_call.1} parent=11 // pred_check
          %p170 = pneg %p40
        $region14: #{tpu_custom_call.1} parent=11 // pred_check_branch
          %172 = sbr.rel (%p170) target = $region16
        $region15: #{tpu_custom_call.1} parent=11 // pred_region
          %s174 = ssub.s32 16, 16
          %175 = vsyncadd [#allocation5], %s174
          %178 = dma.hbm_to_smem %s0, 16, [#allocation2], [#allocation5]
        $region16: #{tpu_custom_call.1} parent=11 // pred_fallthru
          _
        // Predicated region
        $region17: #{tpu_custom_call.1} parent=11 // pred_check
          %p179 = pneg %p87
        $region18: #{tpu_custom_call.1} parent=11 // pred_check_branch
          %181 = sbr.rel (%p179) target = $region20
        $region19: #{tpu_custom_call.1} parent=11 // pred_region
          %s183 = ssub.s32 2048, 2048
          %184 = vsyncadd [#allocation8], %s183
          %s185 = sshll.u32 [#allocation7], 4
          %s186 = int_to_ptr.vmem [resolvable:$true] %s185
          %191 = dma.hbm_to_vmem [thread:$0]  %s2, 2048, %s186, [#allocation8], 128, 128, 8
        $region20: #{tpu_custom_call.1} parent=11 // pred_fallthru
          _
        // Predicated region
        $region21: #{tpu_custom_call.1} parent=11 // pred_check
          %p192 = pneg %p108
        $region22: #{tpu_custom_call.1} parent=11 // pred_check_branch
          %194 = sbr.rel (%p192) target = $region24
        $region23: #{tpu_custom_call.1} parent=11 // pred_region
          %s196 = ssub.s32 2048, 2048
          %197 = vsyncadd [#allocation8], %s196
          %s198 = sshll.u32 [#allocation9], 4
          %s199 = int_to_ptr.vmem [resolvable:$true] %s198
          %204 = dma.hbm_to_vmem [thread:$0]  %s3, 2048, %s199, [#allocation8], 128, 128, 8
        $region24: #{tpu_custom_call.1} parent=11 // pred_fallthru
          _
        // Predicated region
        $region25: #{tpu_custom_call.1} parent=11 // pred_check
          %p205 = pneg %p129
        $region26: #{tpu_custom_call.1} parent=11 // pred_check_branch
          %207 = sbr.rel (%p205) target = $region28
        $region27: #{tpu_custom_call.1} parent=11 // pred_region
          _
        $region28: #{tpu_custom_call.1} parent=11 // pred_fallthru
          _
      $region12: #{tpu_custom_call.1} parent=5 // pred_fallthru
        _
      %p208 = scmp.lt.s32.totalorder %s19, 2
      // Predicated region
      $region29: #{tpu_custom_call.1} parent=5 // pred_check
        %p209 = pneg %p208
      $region30: #{tpu_custom_call.1} parent=5 // pred_check_branch
        %211 = sbr.rel (%p209) target = $region32
      $region31: #{tpu_custom_call.1} parent=5 // pred_region
        // Predicated region
        $region33: #{tpu_custom_call.1} parent=31 // pred_check
          %p212 = pneg %p60
        $region34: #{tpu_custom_call.1} parent=31 // pred_check_branch
          %214 = sbr.rel (%p212) target = $region36
        $region35: #{tpu_custom_call.1} parent=31 // pred_region
          %s215 = sand.u32 %s50, 1
          %s216 = scalar_lea.sflag [#allocation3], %s215
          %s217 = sand.u32 %s50, 1
          %s218 = smul.addr %s217, 128
          %s219 = scalar_lea.vmem [#allocation6], %s218
          %s220 = smul.u32 16, %s19
          %s222 = ssub.s32 2048, 2048
          %223 = vsyncadd %s216, %s222
          %s224 = smul.addr %s220, 128
          %s225 = scalar_lea.hbm %s1, %s224
          %s226 = sshll.u32 %s219, 4
          %s227 = int_to_ptr.vmem [resolvable:$true] %s226
          %232 = dma.hbm_to_vmem [thread:$0]  %s225, 2048, %s227, %s216, 128, 128, 8
        $region36: #{tpu_custom_call.1} parent=31 // pred_fallthru
          _
      $region32: #{tpu_custom_call.1} parent=5 // pred_fallthru
        _
      %p233 = scmp.le.s32.totalorder 1, %s19
      %p234 = scmp.lt.s32.totalorder %s19, 3
      %p235 = pnand %p233, %p234
      %p236 = pneg %p235
      // Predicated region
      $region37: #{tpu_custom_call.1} parent=5 // pred_check
        _
      $region38: #{tpu_custom_call.1} parent=5 // pred_check_branch
        %238 = sbr.rel (%p235) target = $region40
      $region39: #{tpu_custom_call.1} parent=5 // pred_region
        %s239 = ssub.s32 %s19, 1
        // Predicated region
        $region41: #{tpu_custom_call.1} parent=39 // pred_check
          %p240 = pneg %p40
        $region42: #{tpu_custom_call.1} parent=39 // pred_check_branch
          %242 = sbr.rel (%p240) target = $region44
        $region43: #{tpu_custom_call.1} parent=39 // pred_region
          %243 = dma.done [#allocation5], 16
        $region44: #{tpu_custom_call.1} parent=39 // pred_fallthru
          _
        %s244 = sand.u32 %s53, 1
        %s245 = scalar_lea.sflag [#allocation3], %s244
        %s246 = sand.u32 %s53, 1
        %s247 = smul.addr %s246, 128
        %s248 = scalar_lea.vmem [#allocation6], %s247
        // Predicated region
        $region45: #{tpu_custom_call.1} parent=39 // pred_check
          %p249 = pneg %p66
        $region46: #{tpu_custom_call.1} parent=39 // pred_check_branch
          %251 = sbr.rel (%p249) target = $region48
        $region47: #{tpu_custom_call.1} parent=39 // pred_region
          %252 = dma.done %s245, 2048
        $region48: #{tpu_custom_call.1} parent=39 // pred_fallthru
          _
        // Predicated region
        $region49: #{tpu_custom_call.1} parent=39 // pred_check
          %p253 = pneg %p87
        $region50: #{tpu_custom_call.1} parent=39 // pred_check_branch
          %255 = sbr.rel (%p253) target = $region52
        $region51: #{tpu_custom_call.1} parent=39 // pred_region
          %256 = dma.done [#allocation8], 2048
        $region52: #{tpu_custom_call.1} parent=39 // pred_fallthru
          _
        // Predicated region
        $region53: #{tpu_custom_call.1} parent=39 // pred_check
          %p257 = pneg %p108
        $region54: #{tpu_custom_call.1} parent=39 // pred_check_branch
          %259 = sbr.rel (%p257) target = $region56
        $region55: #{tpu_custom_call.1} parent=39 // pred_region
          %260 = dma.done [#allocation8], 2048
        $region56: #{tpu_custom_call.1} parent=39 // pred_fallthru
          _
        %261 = sfence
        %p262 = pneg %p40
        %p263 = pneg %p37
        %s264 = sand.u32 %s53, 1
        %s265 = scalar_lea.sflag [#allocation3], %s264
        %s266 = sand.u32 %s53, 1
        %s267 = smul.addr %s266, 128
        %s268 = scalar_lea.vmem [#allocation6], %s267
        %p269 = pneg %p66
        %p270 = pneg %p63
        %p271 = pneg %p87
        %p272 = pneg %p84
        %p273 = pneg %p108
        %p274 = pneg %p105
        %p275 = pneg %p129
        %p276 = pneg %p126
        %p277 = pneg %p155
        %p278 = pneg %p152
        %s279 = sand.u32 %s142, 1
        %s280 = scalar_lea.sflag [#allocation4], %s279
        %s281 = sand.u32 %s142, 1
        %s282 = smul.addr %s281, 128
        %s283 = scalar_lea.vmem [#allocation10], %s282
        %s284 = smul.u32 16, %s24
        %s285 = smul.u32 16, %s24
        %v286 = vld [vmem:[%s248] sm:$0xff]
        %v287 = vld [vmem:[%s248 + $0x8] sm:$0xff]
        %v288 = vld [vmem:[%s248 + $0x10] sm:$0xff]
        %v289 = vld [vmem:[%s248 + $0x18] sm:$0xff]
        %v290 = vld [vmem:[%s248 + $0x20] sm:$0xff]
        %v291 = vld [vmem:[%s248 + $0x28] sm:$0xff]
        %v292 = vld [vmem:[%s248 + $0x30] sm:$0xff]
        %v293 = vld [vmem:[%s248 + $0x38] sm:$0xff]
        %v294 = vld [vmem:[%s248 + $0x40] sm:$0xff]
        %v295 = vld [vmem:[%s248 + $0x48] sm:$0xff]
        %v296 = vld [vmem:[%s248 + $0x50] sm:$0xff]
        %v297 = vld [vmem:[%s248 + $0x58] sm:$0xff]
        %v298 = vld [vmem:[%s248 + $0x60] sm:$0xff]
        %v299 = vld [vmem:[%s248 + $0x68] sm:$0xff]
        %v300 = vld [vmem:[%s248 + $0x70] sm:$0xff]
        %v301 = vld [vmem:[%s248 + $0x78] sm:$0xff]
        %s302 = sld [smem:[#allocation2]]
        %s303 = sld [smem:[#allocation2 + $0x1]]
        %s304 = sld [smem:[#allocation2 + $0x2]]
        %s305 = sld [smem:[#allocation2 + $0x3]]
        %v306 = vld [vmem:[%s4] sm:$0xff]
        %v307 = vstv %s302
        %v308 = vmul.f32 %v286, %v307
        %v309 = vmul.f32 %v287, %v307
        %v310 = vmul.f32 %v288, %v307
        %v311 = vmul.f32 %v289, %v307
        %v312 = vmul.f32 %v290, %v307
        %v313 = vmul.f32 %v291, %v307
        %v314 = vmul.f32 %v292, %v307
        %v315 = vmul.f32 %v293, %v307
        %v316 = vmul.f32 %v294, %v307
        %v317 = vmul.f32 %v295, %v307
        %v318 = vmul.f32 %v296, %v307
        %v319 = vmul.f32 %v297, %v307
        %v320 = vmul.f32 %v298, %v307
        %v321 = vmul.f32 %v299, %v307
        %v322 = vmul.f32 %v300, %v307
        %v323 = vmul.f32 %v301, %v307
        %v324 = vstv %s303
        %v325 = vadd.f32 %v308, %v324
        %v326 = vadd.f32 %v309, %v324
        %v327 = vadd.f32 %v310, %v324
        %v328 = vadd.f32 %v311, %v324
        %v329 = vadd.f32 %v312, %v324
        %v330 = vadd.f32 %v313, %v324
        %v331 = vadd.f32 %v314, %v324
        %v332 = vadd.f32 %v315, %v324
        %v333 = vadd.f32 %v316, %v324
        %v334 = vadd.f32 %v317, %v324
        %v335 = vadd.f32 %v318, %v324
        %v336 = vadd.f32 %v319, %v324
        %v337 = vadd.f32 %v320, %v324
        %v338 = vadd.f32 %v321, %v324
        %v339 = vadd.f32 %v322, %v324
        %v340 = vadd.f32 %v323, %v324
        %v341 = vld [vmem:[#allocation7] sm:$0xff]
        %v342 = vld [vmem:[#allocation7 + $0x8] sm:$0xff]
        %v343 = vld [vmem:[#allocation7 + $0x10] sm:$0xff]
        %v344 = vld [vmem:[#allocation7 + $0x18] sm:$0xff]
        %v345 = vld [vmem:[#allocation7 + $0x20] sm:$0xff]
        %v346 = vld [vmem:[#allocation7 + $0x28] sm:$0xff]
        %v347 = vld [vmem:[#allocation7 + $0x30] sm:$0xff]
        %v348 = vld [vmem:[#allocation7 + $0x38] sm:$0xff]
        %v349 = vld [vmem:[#allocation7 + $0x40] sm:$0xff]
        %v350 = vld [vmem:[#allocation7 + $0x48] sm:$0xff]
        %v351 = vld [vmem:[#allocation7 + $0x50] sm:$0xff]
        %v352 = vld [vmem:[#allocation7 + $0x58] sm:$0xff]
        %v353 = vld [vmem:[#allocation7 + $0x60] sm:$0xff]
        %v354 = vld [vmem:[#allocation7 + $0x68] sm:$0xff]
        %v355 = vld [vmem:[#allocation7 + $0x70] sm:$0xff]
        %v356 = vld [vmem:[#allocation7 + $0x78] sm:$0xff]
        %v357 = vlaneseq
        %v358 = vshrl.u32 %v357, 7
        %v359 = vsub.s32 0, %v358
        %v360 = vrot.slane %v306, %v359
        %361 = vmatprep.subr.mxu0 0.0
        %362 = vmatpush1.xpose.msra.mxu0 %v341
        %363 = vmatprep.subr.mxu0 0.0
        %364 = vmatpush1.xpose.msra.mxu0 %v342
        %365 = vmatprep.subr.mxu0 0.0
        %366 = vmatpush1.xpose.msra.mxu0 %v343
        %367 = vmatprep.subr.mxu0 0.0
        %368 = vmatpush1.xpose.msra.mxu0 %v344
        %369 = vmatprep.subr.mxu0 0.0
        %370 = vmatpush1.xpose.msra.mxu0 %v345
        %371 = vmatprep.subr.mxu0 0.0
        %372 = vmatpush1.xpose.msra.mxu0 %v346
        %373 = vmatprep.subr.mxu0 0.0
        %374 = vmatpush1.xpose.msra.mxu0 %v347
        %375 = vmatprep.subr.mxu0 0.0
        %376 = vmatpush1.xpose.msra.mxu0 %v348
        %377 = vmatprep.subr.mxu0 0.0
        %378 = vmatpush1.xpose.msra.mxu0 %v349
        %379 = vmatprep.subr.mxu0 0.0
        %380 = vmatpush1.xpose.msra.mxu0 %v350
        %381 = vmatprep.subr.mxu0 0.0
        %382 = vmatpush1.xpose.msra.mxu0 %v351
        %383 = vmatprep.subr.mxu0 0.0
        %384 = vmatpush1.xpose.msra.mxu0 %v352
        %385 = vmatprep.subr.mxu0 0.0
        %386 = vmatpush1.xpose.msra.mxu0 %v353
        %387 = vmatprep.subr.mxu0 0.0
        %388 = vmatpush1.xpose.msra.mxu0 %v354
        %389 = vmatprep.subr.mxu0 0.0
        %390 = vmatpush1.xpose.msra.mxu0 %v355
        %391 = vmatprep.subr.mxu0 0.0
        %392 = vmatpush1.xpose.msra.mxu0 %v356
        %393 = vmatprep.subr.mxu0 0.0
        %394 = vmatpush1.xpose.msra.mxu0 0.0
        %395 = vmatprep.subr.mxu0 0.0
        %396 = vmatpush1.xpose.msra.mxu0 0.0
        %397 = vmatprep.subr.mxu0 0.0
        %398 = vmatpush1.xpose.msra.mxu0 0.0
        %399 = vmatprep.subr.mxu0 0.0
        %400 = vmatpush1.xpose.msra.mxu0 0.0
        %401 = vmatprep.subr.mxu0 0.0
        %402 = vmatpush1.xpose.msra.mxu0 0.0
        %403 = vmatprep.subr.mxu0 0.0
        %404 = vmatpush1.xpose.msra.mxu0 0.0
        %405 = vmatprep.subr.mxu0 0.0
        %406 = vmatpush1.xpose.msra.mxu0 0.0
        %407 = vmatprep.subr.mxu0 0.0
        %408 = vmatpush1.xpose.msra.mxu0 0.0
        %409 = vmatprep.subr.mxu0 0.0
        %410 = vmatpush1.xpose.msra.mxu0 0.0
        %411 = vmatprep.subr.mxu0 0.0
        %412 = vmatpush1.xpose.msra.mxu0 0.0
        %413 = vmatprep.subr.mxu0 0.0
        %414 = vmatpush1.xpose.msra.mxu0 0.0
        %415 = vmatprep.subr.mxu0 0.0
        %416 = vmatpush1.xpose.msra.mxu0 0.0
        %417 = vmatprep.subr.mxu0 0.0
        %418 = vmatpush1.xpose.msra.mxu0 0.0
        %419 = vmatprep.subr.mxu0 0.0
        %420 = vmatpush1.xpose.msra.mxu0 0.0
        %421 = vmatprep.subr.mxu0 0.0
        %422 = vmatpush1.xpose.msra.mxu0 0.0
        %423 = vmatprep.subr.mxu0 0.0
        %424 = vmatpush1.xpose.msra.mxu0 0.0
        %425 = vmatprep.mubr.f32.mxu0 0.0
        %426 = vmatmul.mubr.f32.gmra.mrb[0].mxu0 %v325
        %v427 = vpop.f32.mrb[0].mxu0
        %v428 = vadd.f32 %v360, %v427
        %v429 = vpop.f32.mrb[0].mxu0
        %430 = vmatprep.mubr.f32.mxu0 0.0
        %431 = vmatmul.mubr.f32.gmra.mrb[0].mxu0 %v326
        %v432 = vpop.f32.mrb[0].mxu0
        %v433 = vadd.f32 %v360, %v432
        %v434 = vpop.f32.mrb[0].mxu0
        %435 = vmatprep.mubr.f32.mxu0 0.0
        %436 = vmatmul.mubr.f32.gmra.mrb[0].mxu0 %v327
        %v437 = vpop.f32.mrb[0].mxu0
        %v438 = vadd.f32 %v360, %v437
        %v439 = vpop.f32.mrb[0].mxu0
        %440 = vmatprep.mubr.f32.mxu0 0.0
        %441 = vmatmul.mubr.f32.gmra.mrb[0].mxu0 %v328
        %v442 = vpop.f32.mrb[0].mxu0
        %v443 = vadd.f32 %v360, %v442
        %v444 = vpop.f32.mrb[0].mxu0
        %445 = vmatprep.mubr.f32.mxu0 0.0
        %446 = vmatmul.mubr.f32.gmra.mrb[0].mxu0 %v329
        %v447 = vpop.f32.mrb[0].mxu0
        %v448 = vadd.f32 %v360, %v447
        %v449 = vpop.f32.mrb[0].mxu0
        %450 = vmatprep.mubr.f32.mxu0 0.0
        %451 = vmatmul.mubr.f32.gmra.mrb[0].mxu0 %v330
        %v452 = vpop.f32.mrb[0].mxu0
        %v453 = vadd.f32 %v360, %v452
        %v454 = vpop.f32.mrb[0].mxu0
        %455 = vmatprep.mubr.f32.mxu0 0.0
        %456 = vmatmul.mubr.f32.gmra.mrb[0].mxu0 %v331
        %v457 = vpop.f32.mrb[0].mxu0
        %v458 = vadd.f32 %v360, %v457
        %v459 = vpop.f32.mrb[0].mxu0
        %460 = vmatprep.mubr.f32.mxu0 0.0
        %461 = vmatmul.mubr.f32.gmra.mrb[0].mxu0 %v332
        %v462 = vpop.f32.mrb[0].mxu0
        %v463 = vadd.f32 %v360, %v462
        %v464 = vpop.f32.mrb[0].mxu0
        %465 = vmatprep.mubr.f32.mxu0 0.0
        %466 = vmatmul.mubr.f32.gmra.mrb[0].mxu0 %v333
        %v467 = vpop.f32.mrb[0].mxu0
        %v468 = vadd.f32 %v360, %v467
        %v469 = vpop.f32.mrb[0].mxu0
        %470 = vmatprep.mubr.f32.mxu0 0.0
        %471 = vmatmul.mubr.f32.gmra.mrb[0].mxu0 %v334
        %v472 = vpop.f32.mrb[0].mxu0
        %v473 = vadd.f32 %v360, %v472
        %v474 = vpop.f32.mrb[0].mxu0
        %475 = vmatprep.mubr.f32.mxu0 0.0
        %476 = vmatmul.mubr.f32.gmra.mrb[0].mxu0 %v335
        %v477 = vpop.f32.mrb[0].mxu0
        %v478 = vadd.f32 %v360, %v477
        %v479 = vpop.f32.mrb[0].mxu0
        %480 = vmatprep.mubr.f32.mxu0 0.0
        %481 = vmatmul.mubr.f32.gmra.mrb[0].mxu0 %v336
        %v482 = vpop.f32.mrb[0].mxu0
        %v483 = vadd.f32 %v360, %v482
        %v484 = vpop.f32.mrb[0].mxu0
        %485 = vmatprep.mubr.f32.mxu0 0.0
        %486 = vmatmul.mubr.f32.gmra.mrb[0].mxu0 %v337
        %v487 = vpop.f32.mrb[0].mxu0
        %v488 = vadd.f32 %v360, %v487
        %v489 = vpop.f32.mrb[0].mxu0
        %490 = vmatprep.mubr.f32.mxu0 0.0
        %491 = vmatmul.mubr.f32.gmra.mrb[0].mxu0 %v338
        %v492 = vpop.f32.mrb[0].mxu0
        %v493 = vadd.f32 %v360, %v492
        %v494 = vpop.f32.mrb[0].mxu0
        %495 = vmatprep.mubr.f32.mxu0 0.0
        %496 = vmatmul.mubr.f32.gmra.mrb[0].mxu0 %v339
        %v497 = vpop.f32.mrb[0].mxu0
        %v498 = vadd.f32 %v360, %v497
        %v499 = vpop.f32.mrb[0].mxu0
        %500 = vmatprep.mubr.f32.mxu0 0.0
        %501 = vmatmul.mubr.f32.gmra.mrb[0].mxu0 %v340
        %v502 = vpop.f32.mrb[0].mxu0
        %v503 = vadd.f32 %v360, %v502
        %v504 = vpop.f32.mrb[0].mxu0
        %505 = vdwg.mxu0
        %v506 = vlaneseq
        %v507 = vshrl.u32 %v506, 7
        %v508 = vsub.s32 3, %v507
        %v509 = vrot.slane %v306, %v508
        %v510 = vmul.f32 %v509, %v428
        %v511 = vmul.f32 %v509, %v433
        %v512 = vmul.f32 %v509, %v438
        %v513 = vmul.f32 %v509, %v443
        %v514 = vmul.f32 %v509, %v448
        %v515 = vmul.f32 %v509, %v453
        %v516 = vmul.f32 %v509, %v458
        %v517 = vmul.f32 %v509, %v463
        %v518 = vmul.f32 %v509, %v468
        %v519 = vmul.f32 %v509, %v473
        %v520 = vmul.f32 %v509, %v478
        %v521 = vmul.f32 %v509, %v483
        %v522 = vmul.f32 %v509, %v488
        %v523 = vmul.f32 %v509, %v493
        %v524 = vmul.f32 %v509, %v498
        %v525 = vmul.f32 %v509, %v503
        %v526 = vxor.u32 %v510, 2147483648
        %v527 = vxor.u32 %v511, 2147483648
        %v528 = vxor.u32 %v512, 2147483648
        %v529 = vxor.u32 %v513, 2147483648
        %v530 = vxor.u32 %v514, 2147483648
        %v531 = vxor.u32 %v515, 2147483648
        %v532 = vxor.u32 %v516, 2147483648
        %v533 = vxor.u32 %v517, 2147483648
        %v534 = vxor.u32 %v518, 2147483648
        %v535 = vxor.u32 %v519, 2147483648
        %v536 = vxor.u32 %v520, 2147483648
        %v537 = vxor.u32 %v521, 2147483648
        %v538 = vxor.u32 %v522, 2147483648
        %v539 = vxor.u32 %v523, 2147483648
        %v540 = vxor.u32 %v524, 2147483648
        %v541 = vxor.u32 %v525, 2147483648
        %v542 = vmul.f32 %v526, 1.442695
        %v543 = vpow.pop %v542
        %v544 = vmul.f32 %v527, 1.442695
        %v545 = vpow.pop %v544
        %v546 = vmul.f32 %v528, 1.442695
        %v547 = vpow.pop %v546
        %v548 = vmul.f32 %v529, 1.442695
        %v549 = vpow.pop %v548
        %v550 = vmul.f32 %v530, 1.442695
        %v551 = vpow.pop %v550
        %v552 = vmul.f32 %v531, 1.442695
        %v553 = vpow.pop %v552
        %v554 = vmul.f32 %v532, 1.442695
        %v555 = vpow.pop %v554
        %v556 = vmul.f32 %v533, 1.442695
        %v557 = vpow.pop %v556
        %v558 = vmul.f32 %v534, 1.442695
        %v559 = vpow.pop %v558
        %v560 = vmul.f32 %v535, 1.442695
        %v561 = vpow.pop %v560
        %v562 = vmul.f32 %v536, 1.442695
        %v563 = vpow.pop %v562
        %v564 = vmul.f32 %v537, 1.442695
        %v565 = vpow.pop %v564
        %v566 = vmul.f32 %v538, 1.442695
        %v567 = vpow.pop %v566
        %v568 = vmul.f32 %v539, 1.442695
        %v569 = vpow.pop %v568
        %v570 = vmul.f32 %v540, 1.442695
        %v571 = vpow.pop %v570
        %v572 = vmul.f32 %v541, 1.442695
        %v573 = vpow.pop %v572
        %v574 = vadd.f32 %v543, 1.0
        %v575 = vadd.f32 %v545, 1.0
        %v576 = vadd.f32 %v547, 1.0
        %v577 = vadd.f32 %v549, 1.0
        %v578 = vadd.f32 %v551, 1.0
        %v579 = vadd.f32 %v553, 1.0
        %v580 = vadd.f32 %v555, 1.0
        %v581 = vadd.f32 %v557, 1.0
        %v582 = vadd.f32 %v559, 1.0
        %v583 = vadd.f32 %v561, 1.0
        %v584 = vadd.f32 %v563, 1.0
        %v585 = vadd.f32 %v565, 1.0
        %v586 = vadd.f32 %v567, 1.0
        %v587 = vadd.f32 %v569, 1.0
        %v588 = vadd.f32 %v571, 1.0
        %v589 = vadd.f32 %v573, 1.0
        %v590 = vrcp.pop %v574
        %v591 = vmul.f32 1.0, %v590
        %v592 = vrcp.pop %v575
        %v593 = vmul.f32 1.0, %v592
        %v594 = vrcp.pop %v576
        %v595 = vmul.f32 1.0, %v594
        %v596 = vrcp.pop %v577
        %v597 = vmul.f32 1.0, %v596
        %v598 = vrcp.pop %v578
        %v599 = vmul.f32 1.0, %v598
        %v600 = vrcp.pop %v579
        %v601 = vmul.f32 1.0, %v600
        %v602 = vrcp.pop %v580
        %v603 = vmul.f32 1.0, %v602
        %v604 = vrcp.pop %v581
        %v605 = vmul.f32 1.0, %v604
        %v606 = vrcp.pop %v582
        %v607 = vmul.f32 1.0, %v606
        %v608 = vrcp.pop %v583
        %v609 = vmul.f32 1.0, %v608
        %v610 = vrcp.pop %v584
        %v611 = vmul.f32 1.0, %v610
        %v612 = vrcp.pop %v585
        %v613 = vmul.f32 1.0, %v612
        %v614 = vrcp.pop %v586
        %v615 = vmul.f32 1.0, %v614
        %v616 = vrcp.pop %v587
        %v617 = vmul.f32 1.0, %v616
        %v618 = vrcp.pop %v588
        %v619 = vmul.f32 1.0, %v618
        %v620 = vrcp.pop %v589
        %v621 = vmul.f32 1.0, %v620
        %v622 = vsub.f32 1.0, %v306
        %v623 = vlaneseq
        %v624 = vshrl.u32 %v623, 7
        %v625 = vsub.s32 2, %v624
        %v626 = vrot.slane %v622, %v625
        %v627 = vmul.f32 %v591, %v626
        %v628 = vmul.f32 %v593, %v626
        %v629 = vmul.f32 %v595, %v626
        %v630 = vmul.f32 %v597, %v626
        %v631 = vmul.f32 %v599, %v626
        %v632 = vmul.f32 %v601, %v626
        %v633 = vmul.f32 %v603, %v626
        %v634 = vmul.f32 %v605, %v626
        %v635 = vmul.f32 %v607, %v626
        %v636 = vmul.f32 %v609, %v626
        %v637 = vmul.f32 %v611, %v626
        %v638 = vmul.f32 %v613, %v626
        %v639 = vmul.f32 %v615, %v626
        %v640 = vmul.f32 %v617, %v626
        %v641 = vmul.f32 %v619, %v626
        %v642 = vmul.f32 %v621, %v626
        %v643 = vlaneseq
        %v644 = vshrl.u32 %v643, 7
        %v645 = vsub.s32 2, %v644
        %v646 = vrot.slane %v306, %v645
        %v647 = vadd.f32 %v646, %v627
        %v648 = vadd.f32 %v646, %v628
        %v649 = vadd.f32 %v646, %v629
        %v650 = vadd.f32 %v646, %v630
        %v651 = vadd.f32 %v646, %v631
        %v652 = vadd.f32 %v646, %v632
        %v653 = vadd.f32 %v646, %v633
        %v654 = vadd.f32 %v646, %v634
        %v655 = vadd.f32 %v646, %v635
        %v656 = vadd.f32 %v646, %v636
        %v657 = vadd.f32 %v646, %v637
        %v658 = vadd.f32 %v646, %v638
        %v659 = vadd.f32 %v646, %v639
        %v660 = vadd.f32 %v646, %v640
        %v661 = vadd.f32 %v646, %v641
        %v662 = vadd.f32 %v646, %v642
        %v663 = vmul.f32 %v647, %v428
        %v664 = vmul.f32 %v648, %v433
        %v665 = vmul.f32 %v649, %v438
        %v666 = vmul.f32 %v650, %v443
        %v667 = vmul.f32 %v651, %v448
        %v668 = vmul.f32 %v652, %v453
        %v669 = vmul.f32 %v653, %v458
        %v670 = vmul.f32 %v654, %v463
        %v671 = vmul.f32 %v655, %v468
        %v672 = vmul.f32 %v656, %v473
        %v673 = vmul.f32 %v657, %v478
        %v674 = vmul.f32 %v658, %v483
        %v675 = vmul.f32 %v659, %v488
        %v676 = vmul.f32 %v660, %v493
        %v677 = vmul.f32 %v661, %v498
        %v678 = vmul.f32 %v662, %v503
        %v679 = vstv %s304
        %v680 = vmul.f32 %v663, %v679
        %v681 = vmul.f32 %v664, %v679
        %v682 = vmul.f32 %v665, %v679
        %v683 = vmul.f32 %v666, %v679
        %v684 = vmul.f32 %v667, %v679
        %v685 = vmul.f32 %v668, %v679
        %v686 = vmul.f32 %v669, %v679
        %v687 = vmul.f32 %v670, %v679
        %v688 = vmul.f32 %v671, %v679
        %v689 = vmul.f32 %v672, %v679
        %v690 = vmul.f32 %v673, %v679
        %v691 = vmul.f32 %v674, %v679
        %v692 = vmul.f32 %v675, %v679
        %v693 = vmul.f32 %v676, %v679
        %v694 = vmul.f32 %v677, %v679
        %v695 = vmul.f32 %v678, %v679
        %v696 = vstv %s305
        %v697 = vadd.f32 %v680, %v696
        %v698 = vadd.f32 %v681, %v696
        %v699 = vadd.f32 %v682, %v696
        %v700 = vadd.f32 %v683, %v696
        %v701 = vadd.f32 %v684, %v696
        %v702 = vadd.f32 %v685, %v696
        %v703 = vadd.f32 %v686, %v696
        %v704 = vadd.f32 %v687, %v696
        %v705 = vadd.f32 %v688, %v696
        %v706 = vadd.f32 %v689, %v696
        %v707 = vadd.f32 %v690, %v696
        %v708 = vadd.f32 %v691, %v696
        %v709 = vadd.f32 %v692, %v696
        %v710 = vadd.f32 %v693, %v696
        %v711 = vadd.f32 %v694, %v696
        %v712 = vadd.f32 %v695, %v696
        %v713 = vld [vmem:[#allocation9] sm:$0xff]
        %v714 = vld [vmem:[#allocation9 + $0x8] sm:$0xff]
        %v715 = vld [vmem:[#allocation9 + $0x10] sm:$0xff]
        %v716 = vld [vmem:[#allocation9 + $0x18] sm:$0xff]
        %v717 = vld [vmem:[#allocation9 + $0x20] sm:$0xff]
        %v718 = vld [vmem:[#allocation9 + $0x28] sm:$0xff]
        %v719 = vld [vmem:[#allocation9 + $0x30] sm:$0xff]
        %v720 = vld [vmem:[#allocation9 + $0x38] sm:$0xff]
        %v721 = vld [vmem:[#allocation9 + $0x40] sm:$0xff]
        %v722 = vld [vmem:[#allocation9 + $0x48] sm:$0xff]
        %v723 = vld [vmem:[#allocation9 + $0x50] sm:$0xff]
        %v724 = vld [vmem:[#allocation9 + $0x58] sm:$0xff]
        %v725 = vld [vmem:[#allocation9 + $0x60] sm:$0xff]
        %v726 = vld [vmem:[#allocation9 + $0x68] sm:$0xff]
        %v727 = vld [vmem:[#allocation9 + $0x70] sm:$0xff]
        %v728 = vld [vmem:[#allocation9 + $0x78] sm:$0xff]
        %v729 = vlaneseq
        %v730 = vshrl.u32 %v729, 7
        %v731 = vsub.s32 1, %v730
        %v732 = vrot.slane %v306, %v731
        %733 = vmatprep.subr.mxu0 0.0
        %734 = vmatpush1.xpose.msra.mxu0 %v713
        %735 = vmatprep.subr.mxu0 0.0
        %736 = vmatpush1.xpose.msra.mxu0 %v714
        %737 = vmatprep.subr.mxu0 0.0
        %738 = vmatpush1.xpose.msra.mxu0 %v715
        %739 = vmatprep.subr.mxu0 0.0
        %740 = vmatpush1.xpose.msra.mxu0 %v716
        %741 = vmatprep.subr.mxu0 0.0
        %742 = vmatpush1.xpose.msra.mxu0 %v717
        %743 = vmatprep.subr.mxu0 0.0
        %744 = vmatpush1.xpose.msra.mxu0 %v718
        %745 = vmatprep.subr.mxu0 0.0
        %746 = vmatpush1.xpose.msra.mxu0 %v719
        %747 = vmatprep.subr.mxu0 0.0
        %748 = vmatpush1.xpose.msra.mxu0 %v720
        %749 = vmatprep.subr.mxu0 0.0
        %750 = vmatpush1.xpose.msra.mxu0 %v721
        %751 = vmatprep.subr.mxu0 0.0
        %752 = vmatpush1.xpose.msra.mxu0 %v722
        %753 = vmatprep.subr.mxu0 0.0
        %754 = vmatpush1.xpose.msra.mxu0 %v723
        %755 = vmatprep.subr.mxu0 0.0
        %756 = vmatpush1.xpose.msra.mxu0 %v724
        %757 = vmatprep.subr.mxu0 0.0
        %758 = vmatpush1.xpose.msra.mxu0 %v725
        %759 = vmatprep.subr.mxu0 0.0
        %760 = vmatpush1.xpose.msra.mxu0 %v726
        %761 = vmatprep.subr.mxu0 0.0
        %762 = vmatpush1.xpose.msra.mxu0 %v727
        %763 = vmatprep.subr.mxu0 0.0
        %764 = vmatpush1.xpose.msra.mxu0 %v728
        %765 = vmatprep.subr.mxu0 0.0
        %766 = vmatpush1.xpose.msra.mxu0 0.0
        %767 = vmatprep.subr.mxu0 0.0
        %768 = vmatpush1.xpose.msra.mxu0 0.0
        %769 = vmatprep.subr.mxu0 0.0
        %770 = vmatpush1.xpose.msra.mxu0 0.0
        %771 = vmatprep.subr.mxu0 0.0
        %772 = vmatpush1.xpose.msra.mxu0 0.0
        %773 = vmatprep.subr.mxu0 0.0
        %774 = vmatpush1.xpose.msra.mxu0 0.0
        %775 = vmatprep.subr.mxu0 0.0
        %776 = vmatpush1.xpose.msra.mxu0 0.0
        %777 = vmatprep.subr.mxu0 0.0
        %778 = vmatpush1.xpose.msra.mxu0 0.0
        %779 = vmatprep.subr.mxu0 0.0
        %780 = vmatpush1.xpose.msra.mxu0 0.0
        %781 = vmatprep.subr.mxu0 0.0
        %782 = vmatpush1.xpose.msra.mxu0 0.0
        %783 = vmatprep.subr.mxu0 0.0
        %784 = vmatpush1.xpose.msra.mxu0 0.0
        %785 = vmatprep.subr.mxu0 0.0
        %786 = vmatpush1.xpose.msra.mxu0 0.0
        %787 = vmatprep.subr.mxu0 0.0
        %788 = vmatpush1.xpose.msra.mxu0 0.0
        %789 = vmatprep.subr.mxu0 0.0
        %790 = vmatpush1.xpose.msra.mxu0 0.0
        %791 = vmatprep.subr.mxu0 0.0
        %792 = vmatpush1.xpose.msra.mxu0 0.0
        %793 = vmatprep.subr.mxu0 0.0
        %794 = vmatpush1.xpose.msra.mxu0 0.0
        %795 = vmatprep.subr.mxu0 0.0
        %796 = vmatpush1.xpose.msra.mxu0 0.0
        %797 = vmatprep.mubr.f32.mxu0 0.0
        %798 = vmatmul.mubr.f32.gmra.mrb[0].mxu0 %v697
        %v799 = vpop.f32.mrb[0].mxu0
        %v800 = vadd.f32 %v732, %v799
        %v801 = vpop.f32.mrb[0].mxu0
        %802 = vmatprep.mubr.f32.mxu0 0.0
        %803 = vmatmul.mubr.f32.gmra.mrb[0].mxu0 %v698
        %v804 = vpop.f32.mrb[0].mxu0
        %v805 = vadd.f32 %v732, %v804
        %v806 = vpop.f32.mrb[0].mxu0
        %807 = vmatprep.mubr.f32.mxu0 0.0
        %808 = vmatmul.mubr.f32.gmra.mrb[0].mxu0 %v699
        %v809 = vpop.f32.mrb[0].mxu0
        %v810 = vadd.f32 %v732, %v809
        %v811 = vpop.f32.mrb[0].mxu0
        %812 = vmatprep.mubr.f32.mxu0 0.0
        %813 = vmatmul.mubr.f32.gmra.mrb[0].mxu0 %v700
        %v814 = vpop.f32.mrb[0].mxu0
        %v815 = vadd.f32 %v732, %v814
        %v816 = vpop.f32.mrb[0].mxu0
        %817 = vmatprep.mubr.f32.mxu0 0.0
        %818 = vmatmul.mubr.f32.gmra.mrb[0].mxu0 %v701
        %v819 = vpop.f32.mrb[0].mxu0
        %v820 = vadd.f32 %v732, %v819
        %v821 = vpop.f32.mrb[0].mxu0
        %822 = vmatprep.mubr.f32.mxu0 0.0
        %823 = vmatmul.mubr.f32.gmra.mrb[0].mxu0 %v702
        %v824 = vpop.f32.mrb[0].mxu0
        %v825 = vadd.f32 %v732, %v824
        %v826 = vpop.f32.mrb[0].mxu0
        %827 = vmatprep.mubr.f32.mxu0 0.0
        %828 = vmatmul.mubr.f32.gmra.mrb[0].mxu0 %v703
        %v829 = vpop.f32.mrb[0].mxu0
        %v830 = vadd.f32 %v732, %v829
        %v831 = vpop.f32.mrb[0].mxu0
        %832 = vmatprep.mubr.f32.mxu0 0.0
        %833 = vmatmul.mubr.f32.gmra.mrb[0].mxu0 %v704
        %v834 = vpop.f32.mrb[0].mxu0
        %v835 = vadd.f32 %v732, %v834
        %v836 = vpop.f32.mrb[0].mxu0
        %837 = vmatprep.mubr.f32.mxu0 0.0
        %838 = vmatmul.mubr.f32.gmra.mrb[0].mxu0 %v705
        %v839 = vpop.f32.mrb[0].mxu0
        %v840 = vadd.f32 %v732, %v839
        %v841 = vpop.f32.mrb[0].mxu0
        %842 = vmatprep.mubr.f32.mxu0 0.0
        %843 = vmatmul.mubr.f32.gmra.mrb[0].mxu0 %v706
        %v844 = vpop.f32.mrb[0].mxu0
        %v845 = vadd.f32 %v732, %v844
        %v846 = vpop.f32.mrb[0].mxu0
        %847 = vmatprep.mubr.f32.mxu0 0.0
        %848 = vmatmul.mubr.f32.gmra.mrb[0].mxu0 %v707
        %v849 = vpop.f32.mrb[0].mxu0
        %v850 = vadd.f32 %v732, %v849
        %v851 = vpop.f32.mrb[0].mxu0
        %852 = vmatprep.mubr.f32.mxu0 0.0
        %853 = vmatmul.mubr.f32.gmra.mrb[0].mxu0 %v708
        %v854 = vpop.f32.mrb[0].mxu0
        %v855 = vadd.f32 %v732, %v854
        %v856 = vpop.f32.mrb[0].mxu0
        %857 = vmatprep.mubr.f32.mxu0 0.0
        %858 = vmatmul.mubr.f32.gmra.mrb[0].mxu0 %v709
        %v859 = vpop.f32.mrb[0].mxu0
        %v860 = vadd.f32 %v732, %v859
        %v861 = vpop.f32.mrb[0].mxu0
        %862 = vmatprep.mubr.f32.mxu0 0.0
        %863 = vmatmul.mubr.f32.gmra.mrb[0].mxu0 %v710
        %v864 = vpop.f32.mrb[0].mxu0
        %v865 = vadd.f32 %v732, %v864
        %v866 = vpop.f32.mrb[0].mxu0
        %867 = vmatprep.mubr.f32.mxu0 0.0
        %868 = vmatmul.mubr.f32.gmra.mrb[0].mxu0 %v711
        %v869 = vpop.f32.mrb[0].mxu0
        %v870 = vadd.f32 %v732, %v869
        %v871 = vpop.f32.mrb[0].mxu0
        %872 = vmatprep.mubr.f32.mxu0 0.0
        %873 = vmatmul.mubr.f32.gmra.mrb[0].mxu0 %v712
        %v874 = vpop.f32.mrb[0].mxu0
        %v875 = vadd.f32 %v732, %v874
        %v876 = vpop.f32.mrb[0].mxu0
        %877 = vdwg.mxu0
        %v878 = vlaneseq
        %v879 = vshrl.u32 %v878, 7
        %v880 = vsub.s32 5, %v879
        %v881 = vrot.slane %v306, %v880
        %v882 = vmul.f32 %v881, %v800
        %v883 = vmul.f32 %v881, %v805
        %v884 = vmul.f32 %v881, %v810
        %v885 = vmul.f32 %v881, %v815
        %v886 = vmul.f32 %v881, %v820
        %v887 = vmul.f32 %v881, %v825
        %v888 = vmul.f32 %v881, %v830
        %v889 = vmul.f32 %v881, %v835
        %v890 = vmul.f32 %v881, %v840
        %v891 = vmul.f32 %v881, %v845
        %v892 = vmul.f32 %v881, %v850
        %v893 = vmul.f32 %v881, %v855
        %v894 = vmul.f32 %v881, %v860
        %v895 = vmul.f32 %v881, %v865
        %v896 = vmul.f32 %v881, %v870
        %v897 = vmul.f32 %v881, %v875
        %v898 = vxor.u32 %v882, 2147483648
        %v899 = vxor.u32 %v883, 2147483648
        %v900 = vxor.u32 %v884, 2147483648
        %v901 = vxor.u32 %v885, 2147483648
        %v902 = vxor.u32 %v886, 2147483648
        %v903 = vxor.u32 %v887, 2147483648
        %v904 = vxor.u32 %v888, 2147483648
        %v905 = vxor.u32 %v889, 2147483648
        %v906 = vxor.u32 %v890, 2147483648
        %v907 = vxor.u32 %v891, 2147483648
        %v908 = vxor.u32 %v892, 2147483648
        %v909 = vxor.u32 %v893, 2147483648
        %v910 = vxor.u32 %v894, 2147483648
        %v911 = vxor.u32 %v895, 2147483648
        %v912 = vxor.u32 %v896, 2147483648
        %v913 = vxor.u32 %v897, 2147483648
        %v914 = vmul.f32 %v898, 1.442695
        %v915 = vpow.pop %v914
        %v916 = vmul.f32 %v899, 1.442695
        %v917 = vpow.pop %v916
        %v918 = vmul.f32 %v900, 1.442695
        %v919 = vpow.pop %v918
        %v920 = vmul.f32 %v901, 1.442695
        %v921 = vpow.pop %v920
        %v922 = vmul.f32 %v902, 1.442695
        %v923 = vpow.pop %v922
        %v924 = vmul.f32 %v903, 1.442695
        %v925 = vpow.pop %v924
        %v926 = vmul.f32 %v904, 1.442695
        %v927 = vpow.pop %v926
        %v928 = vmul.f32 %v905, 1.442695
        %v929 = vpow.pop %v928
        %v930 = vmul.f32 %v906, 1.442695
        %v931 = vpow.pop %v930
        %v932 = vmul.f32 %v907, 1.442695
        %v933 = vpow.pop %v932
        %v934 = vmul.f32 %v908, 1.442695
        %v935 = vpow.pop %v934
        %v936 = vmul.f32 %v909, 1.442695
        %v937 = vpow.pop %v936
        %v938 = vmul.f32 %v910, 1.442695
        %v939 = vpow.pop %v938
        %v940 = vmul.f32 %v911, 1.442695
        %v941 = vpow.pop %v940
        %v942 = vmul.f32 %v912, 1.442695
        %v943 = vpow.pop %v942
        %v944 = vmul.f32 %v913, 1.442695
        %v945 = vpow.pop %v944
        %v946 = vadd.f32 %v915, 1.0
        %v947 = vadd.f32 %v917, 1.0
        %v948 = vadd.f32 %v919, 1.0
        %v949 = vadd.f32 %v921, 1.0
        %v950 = vadd.f32 %v923, 1.0
        %v951 = vadd.f32 %v925, 1.0
        %v952 = vadd.f32 %v927, 1.0
        %v953 = vadd.f32 %v929, 1.0
        %v954 = vadd.f32 %v931, 1.0
        %v955 = vadd.f32 %v933, 1.0
        %v956 = vadd.f32 %v935, 1.0
        %v957 = vadd.f32 %v937, 1.0
        %v958 = vadd.f32 %v939, 1.0
        %v959 = vadd.f32 %v941, 1.0
        %v960 = vadd.f32 %v943, 1.0
        %v961 = vadd.f32 %v945, 1.0
        %v962 = vrcp.pop %v946
        %v963 = vmul.f32 1.0, %v962
        %v964 = vrcp.pop %v947
        %v965 = vmul.f32 1.0, %v964
        %v966 = vrcp.pop %v948
        %v967 = vmul.f32 1.0, %v966
        %v968 = vrcp.pop %v949
        %v969 = vmul.f32 1.0, %v968
        %v970 = vrcp.pop %v950
        %v971 = vmul.f32 1.0, %v970
        %v972 = vrcp.pop %v951
        %v973 = vmul.f32 1.0, %v972
        %v974 = vrcp.pop %v952
        %v975 = vmul.f32 1.0, %v974
        %v976 = vrcp.pop %v953
        %v977 = vmul.f32 1.0, %v976
        %v978 = vrcp.pop %v954
        %v979 = vmul.f32 1.0, %v978
        %v980 = vrcp.pop %v955
        %v981 = vmul.f32 1.0, %v980
        %v982 = vrcp.pop %v956
        %v983 = vmul.f32 1.0, %v982
        %v984 = vrcp.pop %v957
        %v985 = vmul.f32 1.0, %v984
        %v986 = vrcp.pop %v958
        %v987 = vmul.f32 1.0, %v986
        %v988 = vrcp.pop %v959
        %v989 = vmul.f32 1.0, %v988
        %v990 = vrcp.pop %v960
        %v991 = vmul.f32 1.0, %v990
        %v992 = vrcp.pop %v961
        %v993 = vmul.f32 1.0, %v992
        %v994 = vlaneseq
        %v995 = vshrl.u32 %v994, 7
        %v996 = vsub.s32 4, %v995
        %v997 = vrot.slane %v622, %v996
        %v998 = vmul.f32 %v963, %v997
        %v999 = vmul.f32 %v965, %v997
        %v1000 = vmul.f32 %v967, %v997
        %v1001 = vmul.f32 %v969, %v997
        %v1002 = vmul.f32 %v971, %v997
        %v1003 = vmul.f32 %v973, %v997
        %v1004 = vmul.f32 %v975, %v997
        %v1005 = vmul.f32 %v977, %v997
        %v1006 = vmul.f32 %v979, %v997
        %v1007 = vmul.f32 %v981, %v997
        %v1008 = vmul.f32 %v983, %v997
        %v1009 = vmul.f32 %v985, %v997
        %v1010 = vmul.f32 %v987, %v997
        %v1011 = vmul.f32 %v989, %v997
        %v1012 = vmul.f32 %v991, %v997
        %v1013 = vmul.f32 %v993, %v997
        %v1014 = vlaneseq
        %v1015 = vshrl.u32 %v1014, 7
        %v1016 = vsub.s32 4, %v1015
        %v1017 = vrot.slane %v306, %v1016
        %v1018 = vadd.f32 %v1017, %v998
        %v1019 = vadd.f32 %v1017, %v999
        %v1020 = vadd.f32 %v1017, %v1000
        %v1021 = vadd.f32 %v1017, %v1001
        %v1022 = vadd.f32 %v1017, %v1002
        %v1023 = vadd.f32 %v1017, %v1003
        %v1024 = vadd.f32 %v1017, %v1004
        %v1025 = vadd.f32 %v1017, %v1005
        %v1026 = vadd.f32 %v1017, %v1006
        %v1027 = vadd.f32 %v1017, %v1007
        %v1028 = vadd.f32 %v1017, %v1008
        %v1029 = vadd.f32 %v1017, %v1009
        %v1030 = vadd.f32 %v1017, %v1010
        %v1031 = vadd.f32 %v1017, %v1011
        %v1032 = vadd.f32 %v1017, %v1012
        %v1033 = vadd.f32 %v1017, %v1013
        %v1034 = vmul.f32 %v1018, %v800
        %v1035 = vmul.f32 %v1019, %v805
        %v1036 = vmul.f32 %v1020, %v810
        %v1037 = vmul.f32 %v1021, %v815
        %v1038 = vmul.f32 %v1022, %v820
        %v1039 = vmul.f32 %v1023, %v825
        %v1040 = vmul.f32 %v1024, %v830
        %v1041 = vmul.f32 %v1025, %v835
        %v1042 = vmul.f32 %v1026, %v840
        %v1043 = vmul.f32 %v1027, %v845
        %v1044 = vmul.f32 %v1028, %v850
        %v1045 = vmul.f32 %v1029, %v855
        %v1046 = vmul.f32 %v1030, %v860
        %v1047 = vmul.f32 %v1031, %v865
        %v1048 = vmul.f32 %v1032, %v870
        %v1049 = vmul.f32 %v1033, %v875
        %v1050 = vadd.f32 %v1034, %v286
        %v1051 = vadd.f32 %v1035, %v287
        %v1052 = vadd.f32 %v1036, %v288
        %v1053 = vadd.f32 %v1037, %v289
        %v1054 = vadd.f32 %v1038, %v290
        %v1055 = vadd.f32 %v1039, %v291
        %v1056 = vadd.f32 %v1040, %v292
        %v1057 = vadd.f32 %v1041, %v293
        %v1058 = vadd.f32 %v1042, %v294
        %v1059 = vadd.f32 %v1043, %v295
        %v1060 = vadd.f32 %v1044, %v296
        %v1061 = vadd.f32 %v1045, %v297
        %v1062 = vadd.f32 %v1046, %v298
        %v1063 = vadd.f32 %v1047, %v299
        %v1064 = vadd.f32 %v1048, %v300
        %v1065 = vadd.f32 %v1049, %v301
        %1066 = vst [vmem:[%s283] sm:$0xff] %v1050
        %1067 = vst [vmem:[%s283 + $0x8] sm:$0xff] %v1051
        %1068 = vst [vmem:[%s283 + $0x10] sm:$0xff] %v1052
        %1069 = vst [vmem:[%s283 + $0x18] sm:$0xff] %v1053
        %1070 = vst [vmem:[%s283 + $0x20] sm:$0xff] %v1054
        %1071 = vst [vmem:[%s283 + $0x28] sm:$0xff] %v1055
        %1072 = vst [vmem:[%s283 + $0x30] sm:$0xff] %v1056
        %1073 = vst [vmem:[%s283 + $0x38] sm:$0xff] %v1057
        %1074 = vst [vmem:[%s283 + $0x40] sm:$0xff] %v1058
        %1075 = vst [vmem:[%s283 + $0x48] sm:$0xff] %v1059
        %1076 = vst [vmem:[%s283 + $0x50] sm:$0xff] %v1060
        %1077 = vst [vmem:[%s283 + $0x58] sm:$0xff] %v1061
        %1078 = vst [vmem:[%s283 + $0x60] sm:$0xff] %v1062
        %1079 = vst [vmem:[%s283 + $0x68] sm:$0xff] %v1063
        %1080 = vst [vmem:[%s283 + $0x70] sm:$0xff] %v1064
        %1081 = vst [vmem:[%s283 + $0x78] sm:$0xff] %v1065
        %s1082 = sand.u32 %s142, 1
        %s1083 = scalar_lea.sflag [#allocation4], %s1082
        %s1084 = sand.u32 %s142, 1
        %s1085 = smul.addr %s1084, 128
        %s1086 = scalar_lea.vmem [#allocation10], %s1085
        // Predicated region
        $region57: #{tpu_custom_call.1} parent=39 // pred_check
          %p1087 = pneg %p152
        $region58: #{tpu_custom_call.1} parent=39 // pred_check_branch
          %1089 = sbr.rel (%p1087) target = $region60
        $region59: #{tpu_custom_call.1} parent=39 // pred_region
          %s1090 = smul.u32 16, %s24
          %s1092 = ssub.s32 2048, 2048
          %1093 = vsyncadd %s1083, %s1092
          %s1094 = smul.addr %s1090, 128
          %s1095 = scalar_lea.hbm %s5, %s1094
          %s1096 = sshll.u32 %s1086, 4
          %s1097 = int_to_ptr.vmem [resolvable:$true] %s1096
          %1102 = dma.vmem_to_hbm [thread:$0]  %s1097, 2048, %s1095, %s1083, 128, 128, 8
        $region60: #{tpu_custom_call.1} parent=39 // pred_fallthru
          _
      $region40: #{tpu_custom_call.1} parent=5 // pred_fallthru
        _
      %p1103 = scmp.le.s32.totalorder 2, %s19
      // Predicated region
      $region61: #{tpu_custom_call.1} parent=5 // pred_check
        %p1104 = pneg %p1103
      $region62: #{tpu_custom_call.1} parent=5 // pred_check_branch
        %1106 = sbr.rel (%p1104) target = $region64
      $region63: #{tpu_custom_call.1} parent=5 // pred_region
        %s1107 = ssub.s32 %s19, 2
        // Predicated region
        $region65: #{tpu_custom_call.1} parent=63 // pred_check
          %p1108 = pneg %p158
        $region66: #{tpu_custom_call.1} parent=63 // pred_check_branch
          %1110 = sbr.rel (%p1108) target = $region68
        $region67: #{tpu_custom_call.1} parent=63 // pred_region
          %s1111 = sand.u32 %s143, 1
          %s1112 = scalar_lea.sflag [#allocation4], %s1111
          %s1113 = sand.u32 %s143, 1
          %s1114 = smul.addr %s1113, 128
          %s1115 = scalar_lea.vmem [#allocation10], %s1114
          %1116 = dma.done %s1112, 2048
        $region68: #{tpu_custom_call.1} parent=63 // pred_fallthru
          _
      $region64: #{tpu_custom_call.1} parent=5 // pred_fallthru
        _
    $region6: #{tpu_custom_call.1} parent=1 // loop_footer
      %s23 = sadd.s32 1, %s19
    $region7: #{tpu_custom_call.1} parent=1 // loop_footer_branch
      %18 = sbr.rel target = $region3
    $region8: #{tpu_custom_call.1} parent=1 // loop_exit
      _
    %1117 = vsyncpa [#allocation3], 1
    %s1118 = scalar_lea.sflag [#allocation3], 1
    %1119 = vsyncpa %s1118, 1
    %1120 = vsyncpa [#allocation8], 1
    %1121 = vsyncpa [#allocation4], 1
    %s1122 = scalar_lea.sflag [#allocation4], 1
    %1123 = vsyncpa %s1122, 1
    %1124 = vsyncpa [#allocation5], 1
    %s1125 = scalar_lea.sflag [#allocation5], 1
    %1126 = vsyncpa %s1125, 1

</llo_original>
